<compile_context>
chip_gen: v5e
topology: v5e:2x2
jax: 0.10.0
libtpu: 0.0.40
codegen_flags: <defaults>
</compile_context>

<pallas_src>
import functools
import math

import jax
import jax.numpy as jnp
from jax import lax
from jax.experimental import pallas as pl
from jax.experimental.pallas import tpu as pltpu


def _hash_bits(shape, row_off_u32, salt_u32):
    """Counter-based PRNG (murmur3-style fmix of row/col/salt).

    Pure vector integer ops -> works under Mosaic TPU lowering *and* in
    interpret mode (unlike pltpu.prng_seed / prng_random_bits)."""
    r = lax.broadcasted_iota(jnp.int32, shape, 0).astype(jnp.uint32) + row_off_u32
    c = lax.broadcasted_iota(jnp.int32, shape, 1).astype(jnp.uint32)
    x = (r * jnp.uint32(0x9E3779B1)) ^ (c * jnp.uint32(0x85EBCA77)) ^ salt_u32
    x = x ^ (x >> 16)
    x = x * jnp.uint32(0x85EBCA6B)
    x = x ^ (x >> 13)
    x = x * jnp.uint32(0xC2B2AE35)
    x = x ^ (x >> 16)
    return x


def _dropout(x, bits, thr_i32, inv_keep):
    # Keep iff top-24 random bits >= thr, P(keep) = 1 - p.  One integer compare
    # per element + a scalar-broadcast multiply (precomputed 1/(1-p)).
    keep = (bits >> 8).astype(jnp.int32) >= thr_i32
    return jnp.where(keep, x * inv_keep, 0.0)


def _model_kernel(fscal_ref, iscal_ref,                 # scalar prefetch (SMEM)
                  x1_ref, x2_ref, x5_ref, x6_ref, x7_ref,  # VMEM inputs
                  o_ref,                                 # VMEM output
                  *, tq):
    b = pl.program_id(0)
    qi = pl.program_id(1)

    inv_x3 = fscal_ref[0]      # 1 / x3
    inv_keep1 = fscal_ref[1]   # 1 / (1 - p1)
    inv_keep2 = fscal_ref[2]   # 1 / (1 - p2)
    thr1 = iscal_ref[0]        # floor(p1 * 2^24)
    thr2 = iscal_ref[1]        # floor(p2 * 2^24)
    seed = iscal_ref[2]

    # Distinct random streams per (batch, q-tile) and per dropout site.
    salt = (seed.astype(jnp.uint32) * jnp.uint32(0x9E3779B1)
            + b.astype(jnp.uint32) * jnp.uint32(0x6C078965))
    row0 = (qi * tq).astype(jnp.uint32)

    # a1 = (x1 / x3) @ x2^T : divisor fused into the (tq, D) operand; transpose
    # handled by dot_general contracting dims, no XLU transpose of x2.
    q = x1_ref[...] * inv_x3                                        # (tq, D)
    a1 = lax.dot_general(q, x2_ref[...], (((1,), (1,)), ((), ())),
                         preferred_element_type=jnp.float32)        # (tq, S)
    c1 = _dropout(a1,
                  _hash_bits(a1.shape, row0, salt ^ jnp.uint32(0x3779C9A1)),
                  thr1, inv_keep1)

    d1 = jnp.dot(c1, x5_ref[...], preferred_element_type=jnp.float32)  # (tq, D)
    b2 = d1 + x6_ref[...]                                              # + (1, D)
    c2 = 0.5 * b2 * (1.0 + lax.erf(b2 * jnp.float32(1.0 / math.sqrt(2.0))))

    f1 = jnp.dot(c2, x7_ref[...], preferred_element_type=jnp.float32)  # (tq, D2)
    h1 = _dropout(f1,
                  _hash_bits(f1.shape, row0, salt ^ jnp.uint32(0xB5297A4D)),
                  thr2, inv_keep2)
    o_ref[...] = jax.nn.sigmoid(h1).astype(o_ref.dtype)


def _pick_q_tile(s):
    if s <= 512:
        return s
    for t in (512, 256, 128):
        if s % t == 0:
            return t
    return s   # fallback: no tiling


def model_forward(x1, x2, x3, x4, x5, x6, x7, x8, *, seed=0):
    B, S, D = x1.shape
    D2 = x7.shape[-1]
    tq = _pick_q_tile(S)
    n_q = S // tq

    p1 = jnp.float32(x4)
    p2 = jnp.float32(x8)
    fscal = jnp.stack([1.0 / jnp.float32(x3),
                       1.0 / (1.0 - p1),
                       1.0 / (1.0 - p2)]).astype(jnp.float32)
    iscal = jnp.concatenate([
        jnp.floor(jnp.stack([p1, p2]) * jnp.float32(1 << 24)).astype(jnp.int32),
        jnp.array([seed], dtype=jnp.int32),
    ])

    grid_spec = pltpu.PrefetchScalarGridSpec(
        num_scalar_prefetch=2,
        grid=(B, n_q),
        in_specs=[
            pl.BlockSpec((None, tq, D), lambda b, q, f, i: (b, q, 0)),   # x1
            pl.BlockSpec((None, S, D),  lambda b, q, f, i: (b, 0, 0)),   # x2
            pl.BlockSpec((None, S, D),  lambda b, q, f, i: (b, 0, 0)),   # x5
            pl.BlockSpec((1, D),        lambda b, q, f, i: (0, 0)),      # x6
            pl.BlockSpec((D, D2),       lambda b, q, f, i: (0, 0)),      # x7
        ],
        out_specs=pl.BlockSpec((None, tq, D2), lambda b, q, f, i: (b, q, 0)),
    )

    return pl.pallas_call(
        functools.partial(_model_kernel, tq=tq),
        out_shape=jax.ShapeDtypeStruct((B, S, D2), jnp.float32),
        grid_spec=grid_spec,
        compiler_params=pltpu.CompilerParams(
            dimension_semantics=("parallel", "parallel"),
            vmem_limit_bytes=48 * 1024 * 1024),
    )(fscal, iscal, x1, x2, x5, x6, x7)


if __name__ == "__main__":
    key = jax.random.PRNGKey(0)
    k1, k2, k5, k6, k7 = jax.random.split(key, 5)

    B, S, D, D2 = 2, 8, 32, 32

    x1 = jax.random.normal(k1, (B, S, D), dtype=jnp.float32)
    x2 = jax.random.normal(k2, (B, S, D), dtype=jnp.float32)
    x3 = float(math.sqrt(D))     # scalar divisor
    x4 = 0.1                     # dropout prob 1
    x5 = jax.random.normal(k5, (B, S, D), dtype=jnp.float32)
    x6 = jax.random.normal(k6, (1, D), dtype=jnp.float32)
    x7 = jax.random.normal(k7, (D, D2), dtype=jnp.float32)
    x8 = 0.2                     # dropout prob 2

    # Deterministic correctness check with dropout disabled (p = 0).
    out_nodrop = model_forward(x1, x2, x3, 0.0, x5, x6, x7, 0.0, seed=0)
    jax.block_until_ready(out_nodrop)

    def _ref(x1, x2, x3, x5, x6, x7):
        hi = jax.lax.Precision.HIGHEST
        a1 = jnp.einsum("bsd,btd->bst", x1, x2, precision=hi) / x3
        d1 = jnp.einsum("bst,btd->bsd", a1, x5, precision=hi) + x6
        c2 = 0.5 * d1 * (1.0 + lax.erf(d1 / math.sqrt(2.0)))
        return jax.nn.sigmoid(jnp.einsum("bsd,de->bse", c2, x7, precision=hi))

    ref = _ref(x1, x2, x3, x5, x6, x7)
    assert jnp.allclose(out_nodrop, ref, rtol=1e-4, atol=1e-4)

    # Full forward with dropout active.
    out = model_forward(x1, x2, x3, x4, x5, x6, x7, x8, seed=0)
    jax.block_until_ready(out)

    assert out.shape == (B, S, D2)
    assert bool(jnp.all(jnp.isfinite(out)))
    assert bool(jnp.all((out >= 0.0) & (out <= 1.0)))   # sigmoid range
    print("KERNEL_OK")
</pallas_src>

<mosaic_0001>
module attributes {stable_mosaic.version = 11 : i64} {
  func.func @_model_kernel(%arg0: i32, %arg1: i32, %arg2: memref<3xf32, #tpu.memory_space<smem>>, %arg3: memref<3xi32, #tpu.memory_space<smem>>, %arg4: memref<1x8x32xf32, #tpu.memory_space<vmem>>, %arg5: memref<1x8x32xf32, #tpu.memory_space<vmem>>, %arg6: memref<1x8x32xf32, #tpu.memory_space<vmem>>, %arg7: memref<1x32xf32, #tpu.memory_space<vmem>>, %arg8: memref<32x32xf32, #tpu.memory_space<vmem>>, %arg9: memref<1x8x32xf32, #tpu.memory_space<vmem>>) attributes {dimension_semantics = [#tpu.dimension_semantics<parallel>, #tpu.dimension_semantics<parallel>], iteration_bounds = array<i64: 2, 1>, scalar_prefetch = 2 : i64, scratch_operands = 0 : i64, tpu.core_type = #tpu.core_type<tc>, window_params = [{transform_indices = @transform_0, window_bounds = array<i64: 1, 8, 32>}, {transform_indices = @transform_1, window_bounds = array<i64: 1, 8, 32>}, {transform_indices = @transform_2, window_bounds = array<i64: 1, 8, 32>}, {pipeline_mode = #tpu.pipeline_mode<synchronous>, transform_indices = @transform_3, window_bounds = array<i64: 1, 32>}, {pipeline_mode = #tpu.pipeline_mode<synchronous>, transform_indices = @transform_4, window_bounds = array<i64: 32, 32>}, {transform_indices = @transform_5, window_bounds = array<i64: 1, 8, 32>}]} {
    %c0 = arith.constant 0 : index
    %0 = memref.load %arg2[%c0] : memref<3xf32, #tpu.memory_space<smem>>
    %c1 = arith.constant 1 : index
    %1 = memref.load %arg2[%c1] : memref<3xf32, #tpu.memory_space<smem>>
    %c2 = arith.constant 2 : index
    %2 = memref.load %arg2[%c2] : memref<3xf32, #tpu.memory_space<smem>>
    %c0_0 = arith.constant 0 : index
    %3 = memref.load %arg3[%c0_0] : memref<3xi32, #tpu.memory_space<smem>>
    %c1_1 = arith.constant 1 : index
    %4 = memref.load %arg3[%c1_1] : memref<3xi32, #tpu.memory_space<smem>>
    %c2_2 = arith.constant 2 : index
    %5 = memref.load %arg3[%c2_2] : memref<3xi32, #tpu.memory_space<smem>>
    %c-1640531535_i32 = arith.constant -1640531535 : i32
    %6 = arith.muli %5, %c-1640531535_i32 : i32
    %c1812433253_i32 = arith.constant 1812433253 : i32
    %7 = arith.muli %arg0, %c1812433253_i32 : i32
    %8 = arith.addi %6, %7 : i32
    %c8_i32 = arith.constant 8 : i32
    %9 = arith.muli %arg1, %c8_i32 : i32
    %c0_3 = arith.constant 0 : index
    %c0_4 = arith.constant 0 : index
    %c0_5 = arith.constant 0 : index
    %10 = vector.load %arg4[%c0_3, %c0_4, %c0_5] : memref<1x8x32xf32, #tpu.memory_space<vmem>>, vector<1x8x32xf32>
    %11 = vector.shape_cast %10 : vector<1x8x32xf32> to vector<8x32xf32>
    %12 = vector.broadcast %0 : f32 to vector<8x32xf32>
    %13 = arith.mulf %11, %12 : vector<8x32xf32>
    %c0_6 = arith.constant 0 : index
    %c0_7 = arith.constant 0 : index
    %c0_8 = arith.constant 0 : index
    %14 = vector.load %arg5[%c0_6, %c0_7, %c0_8] : memref<1x8x32xf32, #tpu.memory_space<vmem>>, vector<1x8x32xf32>
    %15 = vector.shape_cast %14 : vector<1x8x32xf32> to vector<8x32xf32>
    %cst = arith.constant dense<0.000000e+00> : vector<8x8xf32>
    %16 = tpu.matmul %13, %15, %cst {dimension_numbers = #tpu.dot_dimension_numbers<[1], [1], [0], [0], [0, 0, 1, 0], [], []>} : vector<8x32xf32>, vector<8x32xf32>, vector<8x8xf32> -> vector<8x8xf32>
    %c930728353_i32 = arith.constant 930728353 : i32
    %17 = arith.xori %8, %c930728353_i32 : i32
    %18 = tpu.iota {dimensions = array<i32: 0>} : vector<8x8xi32>
    %19 = vector.broadcast %9 : i32 to vector<8x8xi32>
    %20 = arith.addi %18, %19 : vector<8x8xi32>
    %21 = tpu.iota {dimensions = array<i32: 1>} : vector<8x8xi32>
    %c-1640531535_i32_9 = arith.constant -1640531535 : i32
    %22 = vector.broadcast %c-1640531535_i32_9 : i32 to vector<8x8xi32>
    %23 = arith.muli %20, %22 : vector<8x8xi32>
    %c-2048144777_i32 = arith.constant -2048144777 : i32
    %24 = vector.broadcast %c-2048144777_i32 : i32 to vector<8x8xi32>
    %25 = arith.muli %21, %24 : vector<8x8xi32>
    %26 = arith.xori %23, %25 : vector<8x8xi32>
    %27 = vector.broadcast %17 : i32 to vector<8x8xi32>
    %28 = arith.xori %26, %27 : vector<8x8xi32>
    %c16_i32 = arith.constant 16 : i32
    %29 = vector.broadcast %c16_i32 : i32 to vector<8x8xi32>
    %30 = arith.shrui %28, %29 : vector<8x8xi32>
    %31 = arith.xori %28, %30 : vector<8x8xi32>
    %c-2048144789_i32 = arith.constant -2048144789 : i32
    %32 = vector.broadcast %c-2048144789_i32 : i32 to vector<8x8xi32>
    %33 = arith.muli %31, %32 : vector<8x8xi32>
    %c13_i32 = arith.constant 13 : i32
    %34 = vector.broadcast %c13_i32 : i32 to vector<8x8xi32>
    %35 = arith.shrui %33, %34 : vector<8x8xi32>
    %36 = arith.xori %33, %35 : vector<8x8xi32>
    %c-1028477387_i32 = arith.constant -1028477387 : i32
    %37 = vector.broadcast %c-1028477387_i32 : i32 to vector<8x8xi32>
    %38 = arith.muli %36, %37 : vector<8x8xi32>
    %c16_i32_10 = arith.constant 16 : i32
    %39 = vector.broadcast %c16_i32_10 : i32 to vector<8x8xi32>
    %40 = arith.shrui %38, %39 : vector<8x8xi32>
    %41 = arith.xori %38, %40 : vector<8x8xi32>
    %c8_i32_11 = arith.constant 8 : i32
    %42 = vector.broadcast %c8_i32_11 : i32 to vector<8x8xi32>
    %43 = arith.shrui %41, %42 : vector<8x8xi32>
    %44 = vector.broadcast %3 : i32 to vector<8x8xi32>
    %45 = arith.cmpi sge, %43, %44 : vector<8x8xi32>
    %46 = vector.broadcast %1 : f32 to vector<8x8xf32>
    %47 = arith.mulf %16, %46 : vector<8x8xf32>
    %cst_12 = arith.constant 0.000000e+00 : f32
    %48 = vector.broadcast %cst_12 : f32 to vector<8x8xf32>
    %49 = arith.select %45, %47, %48 : vector<8x8xi1>, vector<8x8xf32>
    %c0_13 = arith.constant 0 : index
    %c0_14 = arith.constant 0 : index
    %c0_15 = arith.constant 0 : index
    %50 = vector.load %arg6[%c0_13, %c0_14, %c0_15] : memref<1x8x32xf32, #tpu.memory_space<vmem>>, vector<1x8x32xf32>
    %51 = vector.shape_cast %50 : vector<1x8x32xf32> to vector<8x32xf32>
    %cst_16 = arith.constant dense<0.000000e+00> : vector<8x32xf32>
    %52 = tpu.matmul %49, %51, %cst_16 {dimension_numbers = #tpu.dot_dimension_numbers<[1], [0], [0], [1], [0, 0, 1, 1], [], []>} : vector<8x8xf32>, vector<8x32xf32>, vector<8x32xf32> -> vector<8x32xf32>
    %c0_17 = arith.constant 0 : index
    %c0_18 = arith.constant 0 : index
    %53 = vector.load %arg7[%c0_17, %c0_18] : memref<1x32xf32, #tpu.memory_space<vmem>>, vector<1x32xf32>
    %54 = vector.broadcast %53 : vector<1x32xf32> to vector<8x32xf32>
    %55 = arith.addf %52, %54 : vector<8x32xf32>
    %cst_19 = arith.constant 5.000000e-01 : f32
    %56 = vector.broadcast %cst_19 : f32 to vector<8x32xf32>
    %57 = arith.mulf %56, %55 : vector<8x32xf32>
    %cst_20 = arith.constant 0.707106769 : f32
    %58 = vector.broadcast %cst_20 : f32 to vector<8x32xf32>
    %59 = arith.mulf %55, %58 : vector<8x32xf32>
    %60 = math.erf %59 : vector<8x32xf32>
    %cst_21 = arith.constant 1.000000e+00 : f32
    %61 = vector.broadcast %cst_21 : f32 to vector<8x32xf32>
    %62 = arith.addf %61, %60 : vector<8x32xf32>
    %63 = arith.mulf %57, %62 : vector<8x32xf32>
    %c0_22 = arith.constant 0 : index
    %c0_23 = arith.constant 0 : index
    %64 = vector.load %arg8[%c0_22, %c0_23] : memref<32x32xf32, #tpu.memory_space<vmem>>, vector<32x32xf32>
    %cst_24 = arith.constant dense<0.000000e+00> : vector<8x32xf32>
    %65 = tpu.matmul %63, %64, %cst_24 {dimension_numbers = #tpu.dot_dimension_numbers<[1], [0], [0], [1], [0, 0, 1, 1], [], []>} : vector<8x32xf32>, vector<32x32xf32>, vector<8x32xf32> -> vector<8x32xf32>
    %c-1255572915_i32 = arith.constant -1255572915 : i32
    %66 = arith.xori %8, %c-1255572915_i32 : i32
    %67 = tpu.iota {dimensions = array<i32: 0>} : vector<8x32xi32>
    %68 = vector.broadcast %9 : i32 to vector<8x32xi32>
    %69 = arith.addi %67, %68 : vector<8x32xi32>
    %70 = tpu.iota {dimensions = array<i32: 1>} : vector<8x32xi32>
    %c-1640531535_i32_25 = arith.constant -1640531535 : i32
    %71 = vector.broadcast %c-1640531535_i32_25 : i32 to vector<8x32xi32>
    %72 = arith.muli %69, %71 : vector<8x32xi32>
    %c-2048144777_i32_26 = arith.constant -2048144777 : i32
    %73 = vector.broadcast %c-2048144777_i32_26 : i32 to vector<8x32xi32>
    %74 = arith.muli %70, %73 : vector<8x32xi32>
    %75 = arith.xori %72, %74 : vector<8x32xi32>
    %76 = vector.broadcast %66 : i32 to vector<8x32xi32>
    %77 = arith.xori %75, %76 : vector<8x32xi32>
    %c16_i32_27 = arith.constant 16 : i32
    %78 = vector.broadcast %c16_i32_27 : i32 to vector<8x32xi32>
    %79 = arith.shrui %77, %78 : vector<8x32xi32>
    %80 = arith.xori %77, %79 : vector<8x32xi32>
    %c-2048144789_i32_28 = arith.constant -2048144789 : i32
    %81 = vector.broadcast %c-2048144789_i32_28 : i32 to vector<8x32xi32>
    %82 = arith.muli %80, %81 : vector<8x32xi32>
    %c13_i32_29 = arith.constant 13 : i32
    %83 = vector.broadcast %c13_i32_29 : i32 to vector<8x32xi32>
    %84 = arith.shrui %82, %83 : vector<8x32xi32>
    %85 = arith.xori %82, %84 : vector<8x32xi32>
    %c-1028477387_i32_30 = arith.constant -1028477387 : i32
    %86 = vector.broadcast %c-1028477387_i32_30 : i32 to vector<8x32xi32>
    %87 = arith.muli %85, %86 : vector<8x32xi32>
    %c16_i32_31 = arith.constant 16 : i32
    %88 = vector.broadcast %c16_i32_31 : i32 to vector<8x32xi32>
    %89 = arith.shrui %87, %88 : vector<8x32xi32>
    %90 = arith.xori %87, %89 : vector<8x32xi32>
    %c8_i32_32 = arith.constant 8 : i32
    %91 = vector.broadcast %c8_i32_32 : i32 to vector<8x32xi32>
    %92 = arith.shrui %90, %91 : vector<8x32xi32>
    %93 = vector.broadcast %4 : i32 to vector<8x32xi32>
    %94 = arith.cmpi sge, %92, %93 : vector<8x32xi32>
    %95 = vector.broadcast %2 : f32 to vector<8x32xf32>
    %96 = arith.mulf %65, %95 : vector<8x32xf32>
    %cst_33 = arith.constant 0.000000e+00 : f32
    %97 = vector.broadcast %cst_33 : f32 to vector<8x32xf32>
    %98 = arith.select %94, %96, %97 : vector<8x32xi1>, vector<8x32xf32>
    %99 = arith.negf %98 : vector<8x32xf32>
    %100 = math.exp %99 : vector<8x32xf32>
    %cst_34 = arith.constant 1.000000e+00 : f32
    %101 = vector.broadcast %cst_34 : f32 to vector<8x32xf32>
    %102 = arith.addf %101, %100 : vector<8x32xf32>
    %103 = arith.divf %101, %102 : vector<8x32xf32>
    %c0_35 = arith.constant 0 : index
    %c0_36 = arith.constant 0 : index
    %c0_37 = arith.constant 0 : index
    %104 = vector.load %arg9[%c0_35, %c0_36, %c0_37] : memref<1x8x32xf32, #tpu.memory_space<vmem>>, vector<1x8x32xf32>
    %105 = vector.shape_cast %104 : vector<1x8x32xf32> to vector<8x32xf32>
    %106 = vector.shape_cast %103 : vector<8x32xf32> to vector<1x8x32xf32>
    tpu.vector_store %arg9[%c0_35, %c0_36, %c0_37], %106 {strides = array<i32>} : memref<1x8x32xf32, #tpu.memory_space<vmem>>, vector<1x8x32xf32>,
    return
  }
  func.func @transform_0(%arg0: i32, %arg1: i32, %arg2: memref<3xf32, #tpu.memory_space<smem>>, %arg3: memref<3xi32, #tpu.memory_space<smem>>) -> (i32, i32, i32) {
    %c0_i32 = arith.constant 0 : i32
    %c0_i32_0 = arith.constant 0 : i32
    return %arg0, %arg1, %c0_i32 : i32, i32, i32
  }
  func.func @transform_1(%arg0: i32, %arg1: i32, %arg2: memref<3xf32, #tpu.memory_space<smem>>, %arg3: memref<3xi32, #tpu.memory_space<smem>>) -> (i32, i32, i32) {
    %c0_i32 = arith.constant 0 : i32
    %c0_i32_0 = arith.constant 0 : i32
    %c0_i32_1 = arith.constant 0 : i32
    return %arg0, %c0_i32, %c0_i32_0 : i32, i32, i32
  }
  func.func @transform_2(%arg0: i32, %arg1: i32, %arg2: memref<3xf32, #tpu.memory_space<smem>>, %arg3: memref<3xi32, #tpu.memory_space<smem>>) -> (i32, i32, i32) {
    %c0_i32 = arith.constant 0 : i32
    %c0_i32_0 = arith.constant 0 : i32
    %c0_i32_1 = arith.constant 0 : i32
    return %arg0, %c0_i32, %c0_i32_0 : i32, i32, i32
  }
  func.func @transform_3(%arg0: i32, %arg1: i32, %arg2: memref<3xf32, #tpu.memory_space<smem>>, %arg3: memref<3xi32, #tpu.memory_space<smem>>) -> (i32, i32) {
    %c0_i32 = arith.constant 0 : i32
    %c0_i32_0 = arith.constant 0 : i32
    %c0_i32_1 = arith.constant 0 : i32
    return %c0_i32, %c0_i32_0 : i32, i32
  }
  func.func @transform_4(%arg0: i32, %arg1: i32, %arg2: memref<3xf32, #tpu.memory_space<smem>>, %arg3: memref<3xi32, #tpu.memory_space<smem>>) -> (i32, i32) {
    %c0_i32 = arith.constant 0 : i32
    %c0_i32_0 = arith.constant 0 : i32
    %c0_i32_1 = arith.constant 0 : i32
    return %c0_i32, %c0_i32_0 : i32, i32
  }
  func.func @transform_5(%arg0: i32, %arg1: i32, %arg2: memref<3xf32, #tpu.memory_space<smem>>, %arg3: memref<3xi32, #tpu.memory_space<smem>>) -> (i32, i32, i32) {
    %c0_i32 = arith.constant 0 : i32
    %c0_i32_0 = arith.constant 0 : i32
    return %arg0, %arg1, %c0_i32 : i32, i32, i32
  }
}

</mosaic_0001>

<llo_original>
// kernel: tpu_custom_call.1
$region0: #{tpu_custom_call.1}
  #allocation0 [shape = 'u32[]', space=smem, size = 0x4, offset = 0x4, fixed_abs, tag = 'smem constant byte address 0x4 - core index']
  #allocation1 [shape = 'u32[72,128]{1,0:T(1,128)}', space=vmem, size = 0x9000, scoped, tag = 'internal scratch']
  #allocation2 [shape = 's32[1]{0}', space=sflag, size = 0x4, scoped, tag = 'scoped memory for tpu_custom_call.1']
  #allocation3 [shape = 'u8[512]{0}', space=smem, size = 0x200, scoped, tag = 'prefetched SMEM operand 0']
  #allocation4 [shape = 'u8[512]{0}', space=smem, size = 0x200, scoped, tag = 'prefetched SMEM operand 1']
  %s0 = inlined_call_operand.hbm [shape: f32[3], index: 0, kind: input, shape index: {}]
  %s1 = inlined_call_operand.hbm [shape: s32[3], index: 1, kind: input, shape index: {}]
  %s2 = inlined_call_operand.hbm [shape: f32[2,8,32], index: 2, kind: input, shape index: {}]
  %s3 = inlined_call_operand.hbm [shape: f32[2,8,32], index: 3, kind: input, shape index: {}]
  %s4 = inlined_call_operand.hbm [shape: f32[2,8,32], index: 4, kind: input, shape index: {}]
  %s5 = inlined_call_operand.vmem [shape: f32[1,32], index: 5, kind: input, shape index: {}]
  %s6 = inlined_call_operand.hbm [shape: f32[32,32], index: 6, kind: input, shape index: {}]
  %s7 = inlined_call_operand.hbm [shape: f32[2,8,32], index: 7, kind: output, shape index: {}]
  %s8 = sld [smem:[#allocation0]]
  $region69: #{tpu_custom_call.1} parent=0
    _
  %s10 = ssub.s32 1, %s8
  %s11 = scalar_select 0, %s10, %s8
  %s13 = sshll.u32 %s0, 4
  %s14 = int_to_ptr.hbm [resolvable:$true] %s13
  %16 = dma.hbm_to_smem %s14, 16, [#allocation3], [#allocation2]
  %s18 = sshll.u32 %s1, 4
  %s19 = int_to_ptr.hbm [resolvable:$true] %s18
  %21 = dma.hbm_to_smem %s19, 16, [#allocation4], [#allocation2]
  %23 = dma.done [#allocation2], 32
  %24 = sfence
  $region1: #{tpu_custom_call.1} parent=0
    #allocation5 [shape = 'u8[8192]{0}', space=vmem, size = 0x2000, scoped, tag = 'input window, operand 2']
    #allocation6 [shape = 's32[2]{0}', space=sflag, size = 0x8, scoped, tag = 'scoped memory for tpu_custom_call.1']
    #allocation7 [shape = 's32[2]{0}', space=sflag, size = 0x8, scoped, tag = 'scoped memory for tpu_custom_call.1']
    #allocation8 [shape = 'u8[8192]{0}', space=vmem, size = 0x2000, scoped, tag = 'input window, operand 3']
    #allocation9 [shape = 's32[2]{0}', space=sflag, size = 0x8, scoped, tag = 'scoped memory for tpu_custom_call.1']
    #allocation10 [shape = 'u8[8192]{0}', space=vmem, size = 0x2000, scoped, tag = 'input window, operand 4']
    #allocation11 [shape = 'u8[16384]{0}', space=vmem, size = 0x4000, scoped, tag = 'input window, operand 6, single buffered']
    #allocation12 [shape = 's32[1]{0}', space=sflag, size = 0x4, scoped, tag = 'scoped memory for tpu_custom_call.1']
    #allocation13 [shape = 'u8[8192]{0}', space=vmem, size = 0x2000, scoped, tag = 'output window, operand 0']
    %25 = vsyncpa [#allocation6], 0
    %s26 = scalar_lea.sflag [#allocation6], 1
    %27 = vsyncpa %s26, 0
    %28 = vsyncpa [#allocation9], 0
    %s29 = scalar_lea.sflag [#allocation9], 1
    %30 = vsyncpa %s29, 0
    %31 = vsyncpa [#allocation12], 0
    %32 = vsyncpa [#allocation7], 0
    %s33 = scalar_lea.sflag [#allocation7], 1
    %34 = vsyncpa %s33, 0
    loop: start=0, step=1, limit=4
    $region2: #{tpu_custom_call.1} parent=1 // loop_pre_header
      _
    $region3: #{tpu_custom_call.1} parent=1 // loop_header
      %s36 = sphi 0, %s40
      %p37 = scmp.ge.s32.totalorder %s36, 4
      %s43 = sphi 0, %s55
      %s44 = sphi 0, %s51
      %s45 = sphi 0, %s43
      %s46 = sphi 0, %s44
      %s47 = sphi 0, %s45
      %s48 = sphi 0, %s46
      %s60 = sphi 0, %s62
      %s63 = sphi 0, %s60
      %s64 = sphi 0, %s63
      %s80 = sphi 0, %s64
      %s86 = sphi 0, %s88
      %s89 = sphi 0, %s86
      %s90 = sphi 0, %s89
      %s106 = sphi 0, %s90
      %s112 = sphi 0, %s114
      %s115 = sphi 0, %s112
      %s116 = sphi 0, %s115
      %s132 = sphi 0, %s116
      %s136 = sphi 0, %s136
      %s138 = sphi 0, %s136
      %s139 = sphi 0, %s138
      %s153 = sphi 0, %s139
      %s157 = sphi 0, %s157
      %s159 = sphi 0, %s157
      %s160 = sphi 0, %s159
      %s174 = sphi 0, %s160
      %s182 = sphi 0, %s184
      %s185 = sphi 0, %s182
      %s186 = sphi 0, %s185
      %s202 = sphi 0, %s186
    $region4: #{tpu_custom_call.1} parent=1 // loop_header_branch
      %39 = sbr.rel (%p37) target = $region8
    $region5: #{tpu_custom_call.1} parent=1 // loop_body
      %s41 = ssub.s32 %s36, 1
      %s42 = ssub.s32 %s36, 2
      %s49 = sadd.s32 1, %s44
      %p50 = scmp.ge.s32.totalorder %s49, 1
      %s51 = scalar_select %p50, 0, %s49
      %s52 = sadd.s32 1, %s43
      %s53 = scalar_select %p50, %s52, %s43
      %p54 = scmp.ge.s32.totalorder %s53, 2
      %s55 = scalar_select %p54, 0, %s53
      %s56 = ssub.s32 %s43, %s55
      %s57 = ssub.s32 %s44, %s51
      %s58 = sor.u32 %s56, %s57
      %p59 = scmp.eq.s32.totalorder %s58, 0
      %s61 = sadd.s32 %s60, 1
      %s62 = scalar_select %p59, %s60, %s61
      %p65 = pneg %p59
      %p66 = scmp.eq.s32.totalorder %s36, 1
      %p67 = por %p65, %p66
      %p68 = scmp.ne.s32.totalorder %s60, %s63
      %p69 = scmp.eq.s32.totalorder %s36, 0
      %p70 = por %p68, %p69
      %p71 = scmp.ne.s32.totalorder %s60, %s63
      %p72 = scmp.eq.s32.totalorder %s41, 1
      %p73 = por %p71, %p72
      %p74 = scmp.ne.s32.totalorder %s63, %s64
      %p75 = scmp.eq.s32.totalorder %s41, 0
      %p76 = por %p74, %p75
      %p77 = scmp.ne.s32.totalorder %s63, %s64
      %p78 = scmp.eq.s32.totalorder %s42, 1
      %p79 = por %p77, %p78
      %p81 = scmp.ne.s32.totalorder %s64, %s80
      %p82 = scmp.eq.s32.totalorder %s42, 0
      %p83 = por %p81, %p82
      %s84 = ssub.s32 %s43, %s55
      %p85 = scmp.eq.s32.totalorder %s84, 0
      %s87 = sadd.s32 %s86, 1
      %s88 = scalar_select %p85, %s86, %s87
      %p91 = pneg %p85
      %p92 = scmp.eq.s32.totalorder %s36, 1
      %p93 = por %p91, %p92
      %p94 = scmp.ne.s32.totalorder %s86, %s89
      %p95 = scmp.eq.s32.totalorder %s36, 0
      %p96 = por %p94, %p95
      %p97 = scmp.ne.s32.totalorder %s86, %s89
      %p98 = scmp.eq.s32.totalorder %s41, 1
      %p99 = por %p97, %p98
      %p100 = scmp.ne.s32.totalorder %s89, %s90
      %p101 = scmp.eq.s32.totalorder %s41, 0
      %p102 = por %p100, %p101
      %p103 = scmp.ne.s32.totalorder %s89, %s90
      %p104 = scmp.eq.s32.totalorder %s42, 1
      %p105 = por %p103, %p104
      %p107 = scmp.ne.s32.totalorder %s90, %s106
      %p108 = scmp.eq.s32.totalorder %s42, 0
      %p109 = por %p107, %p108
      %s110 = ssub.s32 %s43, %s55
      %p111 = scmp.eq.s32.totalorder %s110, 0
      %s113 = sadd.s32 %s112, 1
      %s114 = scalar_select %p111, %s112, %s113
      %p117 = pneg %p111
      %p118 = scmp.eq.s32.totalorder %s36, 1
      %p119 = por %p117, %p118
      %p120 = scmp.ne.s32.totalorder %s112, %s115
      %p121 = scmp.eq.s32.totalorder %s36, 0
      %p122 = por %p120, %p121
      %p123 = scmp.ne.s32.totalorder %s112, %s115
      %p124 = scmp.eq.s32.totalorder %s41, 1
      %p125 = por %p123, %p124
      %p126 = scmp.ne.s32.totalorder %s115, %s116
      %p127 = scmp.eq.s32.totalorder %s41, 0
      %p128 = por %p126, %p127
      %p129 = scmp.ne.s32.totalorder %s115, %s116
      %p130 = scmp.eq.s32.totalorder %s42, 1
      %p131 = por %p129, %p130
      %p133 = scmp.ne.s32.totalorder %s116, %s132
      %p134 = scmp.eq.s32.totalorder %s42, 0
      %p135 = por %p133, %p134
      %s137 = sadd.s32 %s136, 1
      %p140 = scmp.eq.s32.totalorder %s36, 1
      %p141 = scmp.ne.s32.totalorder %s136, %s138
      %p142 = scmp.eq.s32.totalorder %s36, 0
      %p143 = por %p141, %p142
      %p144 = scmp.ne.s32.totalorder %s136, %s138
      %p145 = scmp.eq.s32.totalorder %s41, 1
      %p146 = por %p144, %p145
      %p147 = scmp.ne.s32.totalorder %s138, %s139
      %p148 = scmp.eq.s32.totalorder %s41, 0
      %p149 = por %p147, %p148
      %p150 = scmp.ne.s32.totalorder %s138, %s139
      %p151 = scmp.eq.s32.totalorder %s42, 1
      %p152 = por %p150, %p151
      %p154 = scmp.ne.s32.totalorder %s139, %s153
      %p155 = scmp.eq.s32.totalorder %s42, 0
      %p156 = por %p154, %p155
      %s158 = sadd.s32 %s157, 1
      %p161 = scmp.eq.s32.totalorder %s36, 1
      %p162 = scmp.ne.s32.totalorder %s157, %s159
      %p163 = scmp.eq.s32.totalorder %s36, 0
      %p164 = por %p162, %p163
      %p165 = scmp.ne.s32.totalorder %s157, %s159
      %p166 = scmp.eq.s32.totalorder %s41, 1
      %p167 = por %p165, %p166
      %p168 = scmp.ne.s32.totalorder %s159, %s160
      %p169 = scmp.eq.s32.totalorder %s41, 0
      %p170 = por %p168, %p169
      %p171 = scmp.ne.s32.totalorder %s159, %s160
      %p172 = scmp.eq.s32.totalorder %s42, 1
      %p173 = por %p171, %p172
      %p175 = scmp.ne.s32.totalorder %s160, %s174
      %p176 = scmp.eq.s32.totalorder %s42, 0
      %p177 = por %p175, %p176
      %s178 = ssub.s32 %s43, %s55
      %s179 = ssub.s32 %s44, %s51
      %s180 = sor.u32 %s178, %s179
      %p181 = scmp.eq.s32.totalorder %s180, 0
      %s183 = sadd.s32 %s182, 1
      %s184 = scalar_select %p181, %s182, %s183
      %p187 = pneg %p181
      %p188 = scmp.eq.s32.totalorder %s36, 1
      %p189 = por %p187, %p188
      %p190 = scmp.ne.s32.totalorder %s182, %s185
      %p191 = scmp.eq.s32.totalorder %s36, 0
      %p192 = por %p190, %p191
      %p193 = scmp.ne.s32.totalorder %s182, %s185
      %p194 = scmp.eq.s32.totalorder %s41, 1
      %p195 = por %p193, %p194
      %p196 = scmp.ne.s32.totalorder %s185, %s186
      %p197 = scmp.eq.s32.totalorder %s41, 0
      %p198 = por %p196, %p197
      %p199 = scmp.ne.s32.totalorder %s185, %s186
      %p200 = scmp.eq.s32.totalorder %s42, 1
      %p201 = por %p199, %p200
      %p203 = scmp.ne.s32.totalorder %s186, %s202
      %p204 = scmp.eq.s32.totalorder %s42, 0
      %p205 = por %p203, %p204
      %p206 = scmp.le.s32.totalorder 1, %s36
      %p207 = scmp.lt.s32.totalorder %s36, 3
      %p208 = pnand %p206, %p207
      %p209 = pneg %p208
      // Predicated region
      $region9: #{tpu_custom_call.1} parent=5 // pred_check
        _
      $region10: #{tpu_custom_call.1} parent=5 // pred_check_branch
        %211 = sbr.rel (%p208) target = $region12
      $region11: #{tpu_custom_call.1} parent=5 // pred_region
        %s212 = ssub.s32 %s36, 1
        // Predicated region
        $region13: #{tpu_custom_call.1} parent=11 // pred_check
          %p213 = pneg %p149
        $region14: #{tpu_custom_call.1} parent=11 // pred_check_branch
          %215 = sbr.rel (%p213) target = $region16
        $region15: #{tpu_custom_call.1} parent=11 // pred_region
          _
        $region16: #{tpu_custom_call.1} parent=11 // pred_fallthru
          _
        // Predicated region
        $region17: #{tpu_custom_call.1} parent=11 // pred_check
          %p216 = pneg %p170
        $region18: #{tpu_custom_call.1} parent=11 // pred_check_branch
          %218 = sbr.rel (%p216) target = $region20
        $region19: #{tpu_custom_call.1} parent=11 // pred_region
          %220 = vsyncadd [#allocation12], 0
          %s221 = sshll.u32 %s6, 4
          %s222 = int_to_ptr.hbm [resolvable:$true] %s221
          %s223 = sshll.u32 [#allocation11], 4
          %s224 = int_to_ptr.vmem [resolvable:$true] %s223
          %229 = dma.hbm_to_vmem [thread:$0]  %s222, 512, %s224, [#allocation12], 128, 128, 8
        $region20: #{tpu_custom_call.1} parent=11 // pred_fallthru
          _
      $region12: #{tpu_custom_call.1} parent=5 // pred_fallthru
        _
      %p230 = scmp.lt.s32.totalorder %s36, 2
      // Predicated region
      $region21: #{tpu_custom_call.1} parent=5 // pred_check
        %p231 = pneg %p230
      $region22: #{tpu_custom_call.1} parent=5 // pred_check_branch
        %233 = sbr.rel (%p231) target = $region24
      $region23: #{tpu_custom_call.1} parent=5 // pred_region
        // Predicated region
        $region25: #{tpu_custom_call.1} parent=23 // pred_check
          %p234 = pneg %p70
        $region26: #{tpu_custom_call.1} parent=23 // pred_check_branch
          %236 = sbr.rel (%p234) target = $region28
        $region27: #{tpu_custom_call.1} parent=23 // pred_region
          %s237 = sand.u32 %s60, 1
          %s238 = scalar_lea.sflag [#allocation6], %s237
          %s239 = sand.u32 %s60, 1
          %s240 = smul.addr %s239, 8
          %s241 = scalar_lea.vmem [#allocation5], %s240
          %243 = vsyncadd %s238, 0
          %s244 = sadd.s32 %s44, %s43
          %s245 = smul.addr %s244, 8
          %s246 = scalar_lea.hbm %s2, %s245
          %s248 = sshll.u32 %s246, 4
          %s249 = int_to_ptr.hbm [resolvable:$true] %s248
          %s250 = sshll.u32 %s241, 4
          %s251 = int_to_ptr.vmem [resolvable:$true] %s250
          %253 = dma.hbm_to_vmem [thread:$0]  %s249, 128, %s251, %s238
        $region28: #{tpu_custom_call.1} parent=23 // pred_fallthru
          _
        // Predicated region
        $region29: #{tpu_custom_call.1} parent=23 // pred_check
          %p254 = pneg %p96
        $region30: #{tpu_custom_call.1} parent=23 // pred_check_branch
          %256 = sbr.rel (%p254) target = $region32
        $region31: #{tpu_custom_call.1} parent=23 // pred_region
          %s257 = sand.u32 %s36, 1
          %s258 = scalar_lea.sflag [#allocation9], %s257
          %s259 = sand.u32 %s86, 1
          %s260 = smul.addr %s259, 8
          %s261 = scalar_lea.vmem [#allocation8], %s260
          %263 = vsyncadd %s258, 0
          %s264 = smul.addr %s43, 8
          %s265 = scalar_lea.hbm %s3, %s264
          %s267 = sshll.u32 %s265, 4
          %s268 = int_to_ptr.hbm [resolvable:$true] %s267
          %s269 = sshll.u32 %s261, 4
          %s270 = int_to_ptr.vmem [resolvable:$true] %s269
          %272 = dma.hbm_to_vmem [thread:$0]  %s268, 128, %s270, %s258
        $region32: #{tpu_custom_call.1} parent=23 // pred_fallthru
          _
        // Predicated region
        $region33: #{tpu_custom_call.1} parent=23 // pred_check
          %p273 = pneg %p122
        $region34: #{tpu_custom_call.1} parent=23 // pred_check_branch
          %275 = sbr.rel (%p273) target = $region36
        $region35: #{tpu_custom_call.1} parent=23 // pred_region
          %s276 = sand.u32 %s36, 1
          %s277 = scalar_lea.sflag [#allocation9], %s276
          %s278 = sand.u32 %s112, 1
          %s279 = smul.addr %s278, 8
          %s280 = scalar_lea.vmem [#allocation10], %s279
          %282 = vsyncadd %s277, 0
          %s283 = smul.addr %s43, 8
          %s284 = scalar_lea.hbm %s4, %s283
          %s286 = sshll.u32 %s284, 4
          %s287 = int_to_ptr.hbm [resolvable:$true] %s286
          %s288 = sshll.u32 %s280, 4
          %s289 = int_to_ptr.vmem [resolvable:$true] %s288
          %291 = dma.hbm_to_vmem [thread:$0]  %s287, 128, %s289, %s277
        $region36: #{tpu_custom_call.1} parent=23 // pred_fallthru
          _
      $region24: #{tpu_custom_call.1} parent=5 // pred_fallthru
        _
      %p292 = scmp.le.s32.totalorder 1, %s36
      %p293 = scmp.lt.s32.totalorder %s36, 3
      %p294 = pnand %p292, %p293
      %p295 = pneg %p294
      // Predicated region
      $region37: #{tpu_custom_call.1} parent=5 // pred_check
        _
      $region38: #{tpu_custom_call.1} parent=5 // pred_check_branch
        %297 = sbr.rel (%p294) target = $region40
      $region39: #{tpu_custom_call.1} parent=5 // pred_region
        %s298 = ssub.s32 %s36, 1
        %s299 = sand.u32 %s63, 1
        %s300 = scalar_lea.sflag [#allocation6], %s299
        %s301 = sand.u32 %s63, 1
        %s302 = smul.addr %s301, 8
        %s303 = scalar_lea.vmem [#allocation5], %s302
        // Predicated region
        $region41: #{tpu_custom_call.1} parent=39 // pred_check
          %p304 = pneg %p76
        $region42: #{tpu_custom_call.1} parent=39 // pred_check_branch
          %306 = sbr.rel (%p304) target = $region44
        $region43: #{tpu_custom_call.1} parent=39 // pred_region
          %308 = dma.done %s300, 128
        $region44: #{tpu_custom_call.1} parent=39 // pred_fallthru
          _
        %s309 = sand.u32 %s41, 1
        %s310 = scalar_lea.sflag [#allocation9], %s309
        %s311 = sand.u32 %s89, 1
        %s312 = smul.addr %s311, 8
        %s313 = scalar_lea.vmem [#allocation8], %s312
        // Predicated region
        $region45: #{tpu_custom_call.1} parent=39 // pred_check
          %p314 = pneg %p102
        $region46: #{tpu_custom_call.1} parent=39 // pred_check_branch
          %316 = sbr.rel (%p314) target = $region48
        $region47: #{tpu_custom_call.1} parent=39 // pred_region
          %318 = dma.done %s310, 128
        $region48: #{tpu_custom_call.1} parent=39 // pred_fallthru
          _
        %s319 = sand.u32 %s41, 1
        %s320 = scalar_lea.sflag [#allocation9], %s319
        %s321 = sand.u32 %s115, 1
        %s322 = smul.addr %s321, 8
        %s323 = scalar_lea.vmem [#allocation10], %s322
        // Predicated region
        $region49: #{tpu_custom_call.1} parent=39 // pred_check
          %p324 = pneg %p128
        $region50: #{tpu_custom_call.1} parent=39 // pred_check_branch
          %326 = sbr.rel (%p324) target = $region52
        $region51: #{tpu_custom_call.1} parent=39 // pred_region
          %328 = dma.done %s320, 128
        $region52: #{tpu_custom_call.1} parent=39 // pred_fallthru
          _
        // Predicated region
        $region53: #{tpu_custom_call.1} parent=39 // pred_check
          %p329 = pneg %p170
        $region54: #{tpu_custom_call.1} parent=39 // pred_check_branch
          %331 = sbr.rel (%p329) target = $region56
        $region55: #{tpu_custom_call.1} parent=39 // pred_region
          %333 = dma.done [#allocation12], 512
        $region56: #{tpu_custom_call.1} parent=39 // pred_fallthru
          _
        %s334 = sand.u32 %s63, 1
        %s335 = scalar_lea.sflag [#allocation6], %s334
        %s336 = sand.u32 %s63, 1
        %s337 = smul.addr %s336, 8
        %s338 = scalar_lea.vmem [#allocation5], %s337
        %p339 = pneg %p76
        %p340 = pneg %p73
        %s341 = sand.u32 %s41, 1
        %s342 = scalar_lea.sflag [#allocation9], %s341
        %s343 = sand.u32 %s89, 1
        %s344 = smul.addr %s343, 8
        %s345 = scalar_lea.vmem [#allocation8], %s344
        %p346 = pneg %p102
        %p347 = pneg %p99
        %s348 = sand.u32 %s41, 1
        %s349 = scalar_lea.sflag [#allocation9], %s348
        %s350 = sand.u32 %s115, 1
        %s351 = smul.addr %s350, 8
        %s352 = scalar_lea.vmem [#allocation10], %s351
        %p353 = pneg %p128
        %p354 = pneg %p125
        %p355 = pneg %p149
        %p356 = pneg %p146
        %p357 = pneg %p170
        %p358 = pneg %p167
        %p359 = pneg %p198
        %p360 = pneg %p195
        %s361 = sand.u32 %s185, 1
        %s362 = scalar_lea.sflag [#allocation7], %s361
        %s363 = sand.u32 %s185, 1
        %s364 = smul.addr %s363, 8
        %s365 = scalar_lea.vmem [#allocation13], %s364
        %s366 = sld [smem:[#allocation3]]
        %s367 = sld [smem:[#allocation3 + $0x1]]
        %s368 = sld [smem:[#allocation3 + $0x2]]
        %s369 = sld [smem:[#allocation4]]
        %s370 = sld [smem:[#allocation4 + $0x1]]
        %s371 = sld [smem:[#allocation4 + $0x2]]
        %s372 = smul.u32 %s371, 2654435761
        %s373 = smul.u32 %s45, 1812433253
        %s374 = sadd.s32 %s372, %s373
        %s375 = smul.u32 %s46, 8
        %v376 = vld [vmem:[%s303] sm:$0xff]
        %v377 = vstv %s366
        %v378 = vmul.f32 %v376, %v377
        %v379 = vld [vmem:[%s313] sm:$0xff]
        %vm380 = vcmask 261120
        %v382 = vsel %vm380, %v378, 0
        %v385 = vsel %vm380, %v379, 0
        %387 = vmatpush.xpose.msra.mxu0 0.0
        %388 = vmatpush.xpose.msra.mxu0 0.0
        %389 = vmatpush.xpose.msra.mxu0 0.0
        %390 = vmatpush.xpose.msra.mxu0 0.0
        %391 = vmatpush.xpose.msra.mxu0 0.0
        %392 = vmatpush.xpose.msra.mxu0 0.0
        %393 = vmatpush.xpose.msra.mxu0 0.0
        %394 = vmatpush.xpose.msra.mxu0 0.0
        %395 = vmatpush.xpose.msra.mxu0 0.0
        %396 = vmatpush.xpose.msra.mxu0 0.0
        %397 = vmatpush.xpose.msra.mxu0 0.0
        %398 = vmatpush.xpose.msra.mxu0 0.0
        %399 = vmatpush.xpose.msra.mxu0 0.0
        %400 = vmatpush.xpose.msra.mxu0 0.0
        %401 = vmatpush.xpose.msra.mxu0 0.0
        %402 = vmatpush.xpose.msra.mxu0 %v385
        %403 = vmatmul.f32.gmra.mxu0 %v382
        %v404 = vpop.f32.mrf.mxu0
        %v405 = vadd.f32 0.0, %v404
        %406 = vdwg.mxu0
        %s407 = sxor.u32 %s374, 930728353
        %v408 = vlaneseq
        %v409 = vshrl.u32 %v408, 7
        %v410 = vstv %s375
        %v411 = vadd.s32 %v409, %v410
        %v412 = vlaneseq
        %v413 = vand.u32 %v412, 127
        %v414 = vmul.u32 %v411, 2654435761
        %v415 = vmul.u32 %v413, 2246822519
        %v416 = vxor.u32 %v414, %v415
        %v417 = vstv %s407
        %v418 = vxor.u32 %v416, %v417
        %v419 = vshrl.u32 %v418, 16
        %v420 = vxor.u32 %v418, %v419
        %v421 = vmul.u32 %v420, 2246822507
        %v422 = vshrl.u32 %v421, 13
        %v423 = vxor.u32 %v421, %v422
        %v424 = vmul.u32 %v423, 3266489909
        %v425 = vshrl.u32 %v424, 16
        %v426 = vxor.u32 %v424, %v425
        %v427 = vshrl.u32 %v426, 8
        %v428 = vstv %s369
        %vm429 = vcmp.ge.s32.totalorder %v427, %v428
        %v430 = vstv %s367
        %v431 = vmul.f32 %v405, %v430
        %v432 = vsel %vm429, %v431, 0.0
        %v433 = vld [vmem:[%s323] sm:$0xff]
        %v434 = vld [vmem:[%s5] sm:$0x1]
        %v436 = vperm.slane %v434, 0
        %vm438 = vcmask 64512
        %v440 = vsel %vm438, %v432, 0
        %442 = vmatpush.msra.mxu0 0.0
        %443 = vmatpush.msra.mxu0 0.0
        %444 = vmatpush.msra.mxu0 0.0
        %445 = vmatpush.msra.mxu0 0.0
        %446 = vmatpush.msra.mxu0 0.0
        %447 = vmatpush.msra.mxu0 0.0
        %448 = vmatpush.msra.mxu0 0.0
        %449 = vmatpush.msra.mxu0 0.0
        %450 = vmatpush.msra.mxu0 0.0
        %451 = vmatpush.msra.mxu0 0.0
        %452 = vmatpush.msra.mxu0 0.0
        %453 = vmatpush.msra.mxu0 0.0
        %454 = vmatpush.msra.mxu0 0.0
        %455 = vmatpush.msra.mxu0 0.0
        %456 = vmatpush.msra.mxu0 0.0
        %457 = vmatpush.msra.mxu0 %v433
        %458 = vmatmul.f32.gmra.mxu0 %v440
        %v459 = vpop.f32.mrf.mxu0
        %v460 = vadd.f32 %v436, %v459
        %461 = vdwg.mxu0
        %v462 = vmul.f32 %v460, 0.5
        %v463 = vmul.f32 %v460, 0.70710677
        %v464 = vmul.f32 %v463, %v463
        %v465 = vmin.f32 16.0, %v464
        %v466 = vmul.f32 %v465, 2.1237322e-06
        %v467 = vadd.f32 %v466, 0.00028619796
        %v468 = vmul.f32 %v465, %v467
        %v469 = vadd.f32 %v468, 0.0036580483
        %v470 = vmul.f32 %v465, %v469
        %v471 = vadd.f32 %v470, 0.05243302
        %v472 = vmul.f32 %v465, %v471
        %v473 = vadd.f32 %v472, 0.18741608
        %v474 = vmul.f32 %v465, %v473
        %v475 = vadd.f32 %v474, 1.1283791
        %v476 = vmul.f32 %v463, %v475
        %v477 = vmul.f32 %v465, 3.8918573e-05
        %v478 = vadd.f32 %v477, 0.001143296
        %v479 = vmul.f32 %v465, %v478
        %v480 = vadd.f32 %v479, 0.014752088
        %v481 = vmul.f32 %v465, %v480
        %v482 = vadd.f32 %v481, 0.112945676
        %v483 = vmul.f32 %v465, %v482
        %v484 = vadd.f32 %v483, 0.4994258
        %v485 = vmul.f32 %v465, %v484
        %v486 = vadd.f32 %v485, 1.0
        %v487 = vrcp.pop %v486
        %v488 = vmul.f32 %v486, %v487
        %v489 = vsub.f32 1.0, %v488
        %v490 = vmul.f32 %v487, %v489
        %v491 = vadd.f32 %v487, %v490
        %vm492 = vweird.f32 %v486
        %vm493 = vweird.f32 %v487
        %vm494 = vmor %vm492, %vm493
        %v495 = vsel %vm494, %v487, %v491
        %v496 = vand.u32 2147483647, %v486
        %vm497 = vcmp.eq.f32.partialorder %v496, 8.507059e+37
        %v498 = vand.u32 %v486, 2147483648
        %v499 = vor.u32 1.1754944e-38, %v498
        %v500 = vsel %vm497, %v499, %v495
        %v501 = vmul.f32 %v476, %v500
        %v502 = vmin.f32 %v501, 1.0
        %v503 = vmax.f32 %v502, -1.0
        %v504 = vadd.f32 %v503, 1.0
        %v505 = vmul.f32 %v462, %v504
        %v506 = vld [vmem:[#allocation11] sm:$0xff]
        %v507 = vld [vmem:[#allocation11 + $0x8] sm:$0xff]
        %v508 = vld [vmem:[#allocation11 + $0x10] sm:$0xff]
        %v509 = vld [vmem:[#allocation11 + $0x18] sm:$0xff]
        %v511 = vsel %vm380, %v505, 0
        %513 = vmatpush.msra.mxu0 0.0
        %514 = vmatpush.msra.mxu0 0.0
        %515 = vmatpush.msra.mxu0 0.0
        %516 = vmatpush.msra.mxu0 0.0
        %517 = vmatpush.msra.mxu0 0.0
        %518 = vmatpush.msra.mxu0 0.0
        %519 = vmatpush.msra.mxu0 0.0
        %520 = vmatpush.msra.mxu0 0.0
        %521 = vmatpush.msra.mxu0 0.0
        %522 = vmatpush.msra.mxu0 0.0
        %523 = vmatpush.msra.mxu0 0.0
        %524 = vmatpush.msra.mxu0 0.0
        %525 = vmatpush.msra.mxu0 %v509
        %526 = vmatpush.msra.mxu0 %v508
        %527 = vmatpush.msra.mxu0 %v507
        %528 = vmatpush.msra.mxu0 %v506
        %529 = vmatmul.f32.gmra.mxu0 %v511
        %v530 = vpop.f32.mrf.mxu0
        %v531 = vadd.f32 0.0, %v530
        %532 = vdwg.mxu0
        %s533 = sxor.u32 %s374, 3039394381
        %v534 = vstv %s533
        %v535 = vxor.u32 %v416, %v534
        %v536 = vshrl.u32 %v535, 16
        %v537 = vxor.u32 %v535, %v536
        %v538 = vmul.u32 %v537, 2246822507
        %v539 = vshrl.u32 %v538, 13
        %v540 = vxor.u32 %v538, %v539
        %v541 = vmul.u32 %v540, 3266489909
        %v542 = vshrl.u32 %v541, 16
        %v543 = vxor.u32 %v541, %v542
        %v544 = vshrl.u32 %v543, 8
        %v545 = vstv %s370
        %vm546 = vcmp.ge.s32.totalorder %v544, %v545
        %v547 = vstv %s368
        %v548 = vmul.f32 %v531, %v547
        %v549 = vsel %vm546, %v548, 0.0
        %v550 = vxor.u32 %v549, 2147483648
        %v551 = vmul.f32 %v550, 1.442695
        %v552 = vpow.pop %v551
        %v553 = vadd.f32 %v552, 1.0
        %v554 = vrcp.pop %v553
        %v555 = vmul.f32 %v553, %v554
        %v556 = vsub.f32 1.0, %v555
        %v557 = vmul.f32 %v554, %v556
        %v558 = vadd.f32 %v554, %v557
        %vm559 = vweird.f32 %v553
        %vm560 = vweird.f32 %v554
        %vm561 = vmor %vm559, %vm560
        %v562 = vsel %vm561, %v554, %v558
        %v563 = vand.u32 2147483647, %v553
        %vm564 = vcmp.eq.f32.partialorder %v563, 8.507059e+37
        %v565 = vand.u32 %v553, 2147483648
        %v566 = vor.u32 1.1754944e-38, %v565
        %v567 = vsel %vm564, %v566, %v562
        %v568 = vmul.f32 1.0, %v567
        %569 = vst.msk [vmem:[%s365] sm:$0xff] %vm380, %v568
        %s570 = sand.u32 %s185, 1
        %s571 = scalar_lea.sflag [#allocation7], %s570
        %s572 = sand.u32 %s185, 1
        %s573 = smul.addr %s572, 8
        %s574 = scalar_lea.vmem [#allocation13], %s573
        // Predicated region
        $region57: #{tpu_custom_call.1} parent=39 // pred_check
          %p575 = pneg %p195
        $region58: #{tpu_custom_call.1} parent=39 // pred_check_branch
          %577 = sbr.rel (%p575) target = $region60
        $region59: #{tpu_custom_call.1} parent=39 // pred_region
          %579 = vsyncadd %s571, 0
          %s580 = sadd.s32 %s46, %s45
          %s581 = smul.addr %s580, 8
          %s582 = scalar_lea.hbm %s7, %s581
          %s584 = sshll.u32 %s574, 4
          %s585 = int_to_ptr.vmem [resolvable:$true] %s584
          %s586 = sshll.u32 %s582, 4
          %s587 = int_to_ptr.hbm [resolvable:$true] %s586
          %589 = dma.vmem_to_hbm [thread:$0]  %s585, 128, %s587, %s571
        $region60: #{tpu_custom_call.1} parent=39 // pred_fallthru
          _
      $region40: #{tpu_custom_call.1} parent=5 // pred_fallthru
        _
      %p590 = scmp.le.s32.totalorder 2, %s36
      // Predicated region
      $region61: #{tpu_custom_call.1} parent=5 // pred_check
        %p591 = pneg %p590
      $region62: #{tpu_custom_call.1} parent=5 // pred_check_branch
        %593 = sbr.rel (%p591) target = $region64
      $region63: #{tpu_custom_call.1} parent=5 // pred_region
        %s594 = ssub.s32 %s36, 2
        // Predicated region
        $region65: #{tpu_custom_call.1} parent=63 // pred_check
          %p595 = pneg %p201
        $region66: #{tpu_custom_call.1} parent=63 // pred_check_branch
          %597 = sbr.rel (%p595) target = $region68
        $region67: #{tpu_custom_call.1} parent=63 // pred_region
          %s598 = sand.u32 %s186, 1
          %s599 = scalar_lea.sflag [#allocation7], %s598
          %s600 = sand.u32 %s186, 1
          %s601 = smul.addr %s600, 8
          %s602 = scalar_lea.vmem [#allocation13], %s601
          %604 = dma.done %s599, 128
        $region68: #{tpu_custom_call.1} parent=63 // pred_fallthru
          _
      $region64: #{tpu_custom_call.1} parent=5 // pred_fallthru
        _
    $region6: #{tpu_custom_call.1} parent=1 // loop_footer
      %s40 = sadd.s32 1, %s36
    $region7: #{tpu_custom_call.1} parent=1 // loop_footer_branch
      %35 = sbr.rel target = $region3
    $region8: #{tpu_custom_call.1} parent=1 // loop_exit
      _
    %605 = vsyncpa [#allocation6], 1
    %s606 = scalar_lea.sflag [#allocation6], 1
    %607 = vsyncpa %s606, 1
    %608 = vsyncpa [#allocation9], 1
    %s609 = scalar_lea.sflag [#allocation9], 1
    %610 = vsyncpa %s609, 1
    %611 = vsyncpa [#allocation12], 1
    %612 = vsyncpa [#allocation7], 1
    %s613 = scalar_lea.sflag [#allocation7], 1
    %614 = vsyncpa %s613, 1

</llo_original>
